<compile_context>
chip_gen: v6e
topology: v6e:2x2x1
jax: 0.10.0
libtpu: 0.0.40
codegen_flags: <defaults>
</compile_context>

<pallas_src>
import jax
import jax.numpy as jnp
from jax import lax
from jax.experimental import pallas as pl
from jax.experimental.pallas import tpu as pltpu


def _self_norm_attn_kernel(q_ref, k_ref, v_ref, n_ref, o_ref, acc_ref):
    """One (batch, q-block) tile; kv blocks arrive along the last grid axis.

    q_ref:  (tq, H, D)      k_ref, v_ref: (tk, H, D)
    n_ref:  (tq, H)         o_ref: (tq, H, D)
    acc_ref (VMEM scratch, f32): (tq, H, D)
    """
    qi = pl.program_id(1)
    kv = pl.program_id(2)
    tq, H, D = q_ref.shape
    tk = k_ref.shape[0]

    @pl.when(kv == 0)
    def _init():
        acc_ref[...] = jnp.zeros_like(acc_ref)

    # Blocks strictly above the diagonal contribute nothing: skip all compute.
    # (Their K/V DMA is also elided by the clamped index_map in the wrapper.)
    @pl.when(kv <= qi)
    def _compute():
        # tq == tk, so only the diagonal block needs the triangular mask.
        on_diag = kv == qi
        row = lax.broadcasted_iota(jnp.int32, (tq, tk), 0)
        col = lax.broadcasted_iota(jnp.int32, (tq, tk), 1)
        keep = jnp.logical_or(jnp.logical_not(on_diag), col <= row)

        for h in range(H):  # H is small and static -> unrolled plain matmuls
            q_h = q_ref[:, h, :]                       # (tq, D)
            k_h = k_ref[:, h, :]                       # (tk, D)
            v_h = v_ref[:, h, :]                       # (tk, D)
            # scores[t, s] = <q_t, k_s>  (MXU, f32 accumulate)
            s = lax.dot_general(q_h, k_h, (((1,), (1,)), ((), ())),
                                preferred_element_type=jnp.float32)
            s = jnp.where(keep, s, 0.0)
            acc_ref[:, h, :] += lax.dot_general(
                s.astype(v_h.dtype), v_h, (((1,), (0,)), ((), ())),
                preferred_element_type=jnp.float32)

    # Finalize: apply the per-row 1/exp(n) scaling once on the (tq, H, D)
    # output instead of over the full (S, S) score matrix.
    @pl.when(kv == pl.num_programs(2) - 1)
    def _finalize():
        scale = jnp.exp(-n_ref[...].astype(jnp.float32))          # (tq, H)
        o_ref[...] = (acc_ref[...] * scale[:, :, None]).astype(o_ref.dtype)


def _choose_block(seqlen, max_block=256):
    if seqlen <= max_block:
        return seqlen
    for blk in (256, 128, 64, 32, 16, 8):
        if blk <= max_block and seqlen % blk == 0:
            return blk
    return seqlen  # fallback: whole sequence in one block


def self_norm_attention(qk, v, n, *, block=None):
    """qk: (B, S, 2, H, D), v: (B, S, H, D), n: (B, S, H) -> (B, S, H, D)."""
    B, S, two, H, D = qk.shape
    assert two == 2, "qk must have q and k stacked on dim 2"
    if block is None:
        block = _choose_block(S)
    assert S % block == 0, "sequence length must be divisible by the block size"
    nblk = S // block
    grid = (B, nblk, nblk)

    qk_block = (None, block, None, H, D)
    q_spec = pl.BlockSpec(qk_block, lambda b, qi, kv: (b, qi, 0, 0, 0))
    # Clamp kv: above-diagonal blocks (skipped in the kernel) map to the same
    # block index as the previous step, so Pallas elides their K/V DMA.
    k_spec = pl.BlockSpec(qk_block,
                          lambda b, qi, kv: (b, jnp.minimum(kv, qi), 1, 0, 0))
    v_spec = pl.BlockSpec((None, block, H, D),
                          lambda b, qi, kv: (b, jnp.minimum(kv, qi), 0, 0))
    n_spec = pl.BlockSpec((None, block, H), lambda b, qi, kv: (b, qi, 0))
    o_spec = pl.BlockSpec((None, block, H, D), lambda b, qi, kv: (b, qi, 0, 0))

    return pl.pallas_call(
        _self_norm_attn_kernel,
        out_shape=jax.ShapeDtypeStruct((B, S, H, D), qk.dtype),
        grid_spec=pltpu.PrefetchScalarGridSpec(
            num_scalar_prefetch=0,
            grid=grid,
            in_specs=[q_spec, k_spec, v_spec, n_spec],
            out_specs=o_spec,
            scratch_shapes=[pltpu.VMEM((block, H, D), jnp.float32)],
        ),
        compiler_params=pltpu.CompilerParams(
            dimension_semantics=("parallel", "parallel", "arbitrary"),
            vmem_limit_bytes=48 * 1024 * 1024,
        ),
    )(qk, qk, v, n)


if __name__ == "__main__":
    key = jax.random.PRNGKey(0)
    B, S, H, D = 2, 16, 2, 32
    k1, k2, k3 = jax.random.split(key, 3)

    qk = jax.random.normal(k1, (B, S, 2, H, D), dtype=jnp.float32)
    v = jax.random.normal(k2, (B, S, H, D), dtype=jnp.float32)
    n = jax.random.normal(k3, (B, S, H), dtype=jnp.float32)

    # block=8 (< S) exercises the multi-block accumulation + causal-skip path.
    out = self_norm_attention(qk, v, n, block=8)
    out = jax.block_until_ready(out)

    # Pure-JAX reference mirroring the PyTorch forward exactly.
    q_r, k_r = qk[:, :, 0], qk[:, :, 1]
    scores = jnp.einsum("bthd,bshd->bhts", q_r, k_r)
    mask = jnp.tril(jnp.ones((S, S), dtype=scores.dtype))
    n_e = jnp.exp(jnp.transpose(n, (0, 2, 1)))
    attn = (scores * mask) / n_e[:, :, :, None]
    ref = jnp.einsum("bhts,bshd->bthd", attn, v)

    assert jnp.allclose(out, ref, atol=1e-4, rtol=1e-4), "mismatch vs reference"
    print("KERNEL_OK")
</pallas_src>

<mosaic_0001>
module attributes {stable_mosaic.version = 11 : i64} {
  func.func @_self_norm_attn_kernel(%arg0: i32, %arg1: i32, %arg2: i32, %arg3: memref<1x8x1x2x32xf32, #tpu.memory_space<vmem>>, %arg4: memref<1x8x1x2x32xf32, #tpu.memory_space<vmem>>, %arg5: memref<1x8x2x32xf32, #tpu.memory_space<vmem>>, %arg6: memref<1x8x2xf32, #tpu.memory_space<vmem>>, %arg7: memref<1x8x2x32xf32, #tpu.memory_space<vmem>>, %arg8: memref<8x2x32xf32, #tpu.memory_space<vmem>>) attributes {dimension_semantics = [#tpu.dimension_semantics<parallel>, #tpu.dimension_semantics<parallel>, #tpu.dimension_semantics<arbitrary>], iteration_bounds = array<i64: 2, 2, 2>, scalar_prefetch = 0 : i64, scratch_operands = 1 : i64, tpu.core_type = #tpu.core_type<tc>, window_params = [{transform_indices = @transform_0, window_bounds = array<i64: 1, 8, 1, 2, 32>}, {transform_indices = @transform_1, window_bounds = array<i64: 1, 8, 1, 2, 32>}, {transform_indices = @transform_2, window_bounds = array<i64: 1, 8, 2, 32>}, {transform_indices = @transform_3, window_bounds = array<i64: 1, 8, 2>}, {transform_indices = @transform_4, window_bounds = array<i64: 1, 8, 2, 32>}]} {
    %c0_i32 = arith.constant 0 : i32
    %0 = arith.cmpi eq, %arg2, %c0_i32 : i32
    %1 = arith.extui %0 : i1 to i32
    %c0_i32_0 = arith.constant 0 : i32
    %2 = arith.cmpi ne, %1, %c0_i32_0 : i32
    scf.if %2 {
      %cst = arith.constant 0.000000e+00 : f32
      %9 = vector.broadcast %cst : f32 to vector<8x2x32xf32>
      %c0 = arith.constant 0 : index
      %c0_3 = arith.constant 0 : index
      %c0_4 = arith.constant 0 : index
      %10 = vector.load %arg8[%c0, %c0_3, %c0_4] : memref<8x2x32xf32, #tpu.memory_space<vmem>>, vector<8x2x32xf32>
      tpu.vector_store %arg8[%c0, %c0_3, %c0_4], %9 {strides = array<i32>} : memref<8x2x32xf32, #tpu.memory_space<vmem>>, vector<8x2x32xf32>,
    } else {
    }
    %3 = arith.cmpi sle, %arg2, %arg1 : i32
    %4 = arith.extui %3 : i1 to i32
    %c0_i32_1 = arith.constant 0 : i32
    %5 = arith.cmpi ne, %4, %c0_i32_1 : i32
    scf.if %5 {
      %9 = arith.cmpi eq, %arg2, %arg1 : i32
      %10 = tpu.iota {dimensions = array<i32: 0>} : vector<8x8xi32>
      %11 = tpu.iota {dimensions = array<i32: 1>} : vector<8x8xi32>
      %true = arith.constant true
      %12 = arith.xori %9, %true : i1
      %13 = arith.cmpi sle, %11, %10 : vector<8x8xi32>
      %14 = vector.broadcast %12 : i1 to vector<8x8xi1>
      %15 = arith.ori %14, %13 : vector<8x8xi1>
      %c0 = arith.constant 0 : index
      %c0_3 = arith.constant 0 : index
      %c0_4 = arith.constant 0 : index
      %c0_5 = arith.constant 0 : index
      %c0_6 = arith.constant 0 : index
      %16 = vector.load %arg3[%c0, %c0_3, %c0_4, %c0_5, %c0_6] : memref<1x8x1x2x32xf32, #tpu.memory_space<vmem>>, vector<1x8x1x1x32xf32>
      %17 = vector.shape_cast %16 : vector<1x8x1x1x32xf32> to vector<8x32xf32>
      %c0_7 = arith.constant 0 : index
      %c0_8 = arith.constant 0 : index
      %c0_9 = arith.constant 0 : index
      %c0_10 = arith.constant 0 : index
      %c0_11 = arith.constant 0 : index
      %18 = vector.load %arg4[%c0_7, %c0_8, %c0_9, %c0_10, %c0_11] : memref<1x8x1x2x32xf32, #tpu.memory_space<vmem>>, vector<1x8x1x1x32xf32>
      %19 = vector.shape_cast %18 : vector<1x8x1x1x32xf32> to vector<8x32xf32>
      %c0_12 = arith.constant 0 : index
      %c0_13 = arith.constant 0 : index
      %c0_14 = arith.constant 0 : index
      %c0_15 = arith.constant 0 : index
      %20 = vector.load %arg5[%c0_12, %c0_13, %c0_14, %c0_15] : memref<1x8x2x32xf32, #tpu.memory_space<vmem>>, vector<1x8x1x32xf32>
      %21 = vector.shape_cast %20 : vector<1x8x1x32xf32> to vector<8x32xf32>
      %cst = arith.constant dense<0.000000e+00> : vector<8x8xf32>
      %22 = tpu.matmul %17, %19, %cst {dimension_numbers = #tpu.dot_dimension_numbers<[1], [1], [0], [0], [0, 0, 1, 0], [], []>} : vector<8x32xf32>, vector<8x32xf32>, vector<8x8xf32> -> vector<8x8xf32>
      %cst_16 = arith.constant 0.000000e+00 : f32
      %23 = vector.broadcast %cst_16 : f32 to vector<8x8xf32>
      %24 = arith.select %15, %22, %23 : vector<8x8xi1>, vector<8x8xf32>
      %c0_17 = arith.constant 0 : index
      %c0_18 = arith.constant 0 : index
      %c0_19 = arith.constant 0 : index
      %25 = vector.load %arg8[%c0_17, %c0_18, %c0_19] : memref<8x2x32xf32, #tpu.memory_space<vmem>>, vector<8x1x32xf32>
      %26 = vector.shape_cast %25 : vector<8x1x32xf32> to vector<8x32xf32>
      %cst_20 = arith.constant dense<0.000000e+00> : vector<8x32xf32>
      %27 = tpu.matmul %24, %21, %cst_20 {dimension_numbers = #tpu.dot_dimension_numbers<[1], [0], [0], [1], [0, 0, 1, 1], [], []>} : vector<8x8xf32>, vector<8x32xf32>, vector<8x32xf32> -> vector<8x32xf32>
      %28 = arith.addf %26, %27 : vector<8x32xf32>
      %c0_21 = arith.constant 0 : index
      %c0_22 = arith.constant 0 : index
      %c0_23 = arith.constant 0 : index
      %29 = vector.load %arg8[%c0_21, %c0_22, %c0_23] : memref<8x2x32xf32, #tpu.memory_space<vmem>>, vector<8x1x32xf32>
      %30 = vector.shape_cast %29 : vector<8x1x32xf32> to vector<8x32xf32>
      %31 = vector.shape_cast %28 : vector<8x32xf32> to vector<8x1x32xf32>
      tpu.vector_store %arg8[%c0_21, %c0_22, %c0_23], %31 {strides = array<i32>} : memref<8x2x32xf32, #tpu.memory_space<vmem>>, vector<8x1x32xf32>,
      %c0_24 = arith.constant 0 : index
      %c0_25 = arith.constant 0 : index
      %c0_26 = arith.constant 0 : index
      %c1 = arith.constant 1 : index
      %c0_27 = arith.constant 0 : index
      %32 = vector.load %arg3[%c0_24, %c0_25, %c0_26, %c1, %c0_27] : memref<1x8x1x2x32xf32, #tpu.memory_space<vmem>>, vector<1x8x1x1x32xf32>
      %33 = vector.shape_cast %32 : vector<1x8x1x1x32xf32> to vector<8x32xf32>
      %c0_28 = arith.constant 0 : index
      %c0_29 = arith.constant 0 : index
      %c0_30 = arith.constant 0 : index
      %c1_31 = arith.constant 1 : index
      %c0_32 = arith.constant 0 : index
      %34 = vector.load %arg4[%c0_28, %c0_29, %c0_30, %c1_31, %c0_32] : memref<1x8x1x2x32xf32, #tpu.memory_space<vmem>>, vector<1x8x1x1x32xf32>
      %35 = vector.shape_cast %34 : vector<1x8x1x1x32xf32> to vector<8x32xf32>
      %c0_33 = arith.constant 0 : index
      %c0_34 = arith.constant 0 : index
      %c1_35 = arith.constant 1 : index
      %c0_36 = arith.constant 0 : index
      %36 = vector.load %arg5[%c0_33, %c0_34, %c1_35, %c0_36] : memref<1x8x2x32xf32, #tpu.memory_space<vmem>>, vector<1x8x1x32xf32>
      %37 = vector.shape_cast %36 : vector<1x8x1x32xf32> to vector<8x32xf32>
      %cst_37 = arith.constant dense<0.000000e+00> : vector<8x8xf32>
      %38 = tpu.matmul %33, %35, %cst_37 {dimension_numbers = #tpu.dot_dimension_numbers<[1], [1], [0], [0], [0, 0, 1, 0], [], []>} : vector<8x32xf32>, vector<8x32xf32>, vector<8x8xf32> -> vector<8x8xf32>
      %cst_38 = arith.constant 0.000000e+00 : f32
      %39 = vector.broadcast %cst_38 : f32 to vector<8x8xf32>
      %40 = arith.select %15, %38, %39 : vector<8x8xi1>, vector<8x8xf32>
      %c0_39 = arith.constant 0 : index
      %c1_40 = arith.constant 1 : index
      %c0_41 = arith.constant 0 : index
      %41 = vector.load %arg8[%c0_39, %c1_40, %c0_41] : memref<8x2x32xf32, #tpu.memory_space<vmem>>, vector<8x1x32xf32>
      %42 = vector.shape_cast %41 : vector<8x1x32xf32> to vector<8x32xf32>
      %cst_42 = arith.constant dense<0.000000e+00> : vector<8x32xf32>
      %43 = tpu.matmul %40, %37, %cst_42 {dimension_numbers = #tpu.dot_dimension_numbers<[1], [0], [0], [1], [0, 0, 1, 1], [], []>} : vector<8x8xf32>, vector<8x32xf32>, vector<8x32xf32> -> vector<8x32xf32>
      %44 = arith.addf %42, %43 : vector<8x32xf32>
      %c0_43 = arith.constant 0 : index
      %c1_44 = arith.constant 1 : index
      %c0_45 = arith.constant 0 : index
      %45 = vector.load %arg8[%c0_43, %c1_44, %c0_45] : memref<8x2x32xf32, #tpu.memory_space<vmem>>, vector<8x1x32xf32>
      %46 = vector.shape_cast %45 : vector<8x1x32xf32> to vector<8x32xf32>
      %47 = vector.shape_cast %44 : vector<8x32xf32> to vector<8x1x32xf32>
      tpu.vector_store %arg8[%c0_43, %c1_44, %c0_45], %47 {strides = array<i32>} : memref<8x2x32xf32, #tpu.memory_space<vmem>>, vector<8x1x32xf32>,
    } else {
    }
    %c1_i32 = arith.constant 1 : i32
    %6 = arith.cmpi eq, %arg2, %c1_i32 : i32
    %7 = arith.extui %6 : i1 to i32
    %c0_i32_2 = arith.constant 0 : i32
    %8 = arith.cmpi ne, %7, %c0_i32_2 : i32
    scf.if %8 {
      %c0 = arith.constant 0 : index
      %c0_3 = arith.constant 0 : index
      %c0_4 = arith.constant 0 : index
      %9 = vector.load %arg6[%c0, %c0_3, %c0_4] : memref<1x8x2xf32, #tpu.memory_space<vmem>>, vector<1x8x2xf32>
      %10 = vector.shape_cast %9 : vector<1x8x2xf32> to vector<8x2xf32>
      %cst = arith.constant 0.000000e+00 : f32
      %11 = vector.broadcast %cst : f32 to vector<8x2xf32>
      %12 = arith.subf %11, %10 : vector<8x2xf32>
      %13 = math.exp %12 : vector<8x2xf32>
      %c0_5 = arith.constant 0 : index
      %c0_6 = arith.constant 0 : index
      %c0_7 = arith.constant 0 : index
      %14 = vector.load %arg8[%c0_5, %c0_6, %c0_7] : memref<8x2x32xf32, #tpu.memory_space<vmem>>, vector<8x2x32xf32>
      %15 = vector.shape_cast %13 : vector<8x2xf32> to vector<8x2x1xf32>
      %16 = vector.broadcast %15 : vector<8x2x1xf32> to vector<8x2x32xf32>
      %17 = arith.mulf %14, %16 : vector<8x2x32xf32>
      %c0_8 = arith.constant 0 : index
      %c0_9 = arith.constant 0 : index
      %c0_10 = arith.constant 0 : index
      %c0_11 = arith.constant 0 : index
      %18 = vector.load %arg7[%c0_8, %c0_9, %c0_10, %c0_11] : memref<1x8x2x32xf32, #tpu.memory_space<vmem>>, vector<1x8x2x32xf32>
      %19 = vector.shape_cast %18 : vector<1x8x2x32xf32> to vector<8x2x32xf32>
      %20 = vector.shape_cast %17 : vector<8x2x32xf32> to vector<1x8x2x32xf32>
      tpu.vector_store %arg7[%c0_8, %c0_9, %c0_10, %c0_11], %20 {strides = array<i32>} : memref<1x8x2x32xf32, #tpu.memory_space<vmem>>, vector<1x8x2x32xf32>,
    } else {
    }
    return
  }
  func.func @transform_0(%arg0: i32, %arg1: i32, %arg2: i32) -> (i32, i32, i32, i32, i32) {
    %c0_i32 = arith.constant 0 : i32
    %c0_i32_0 = arith.constant 0 : i32
    %c0_i32_1 = arith.constant 0 : i32
    %c0_i32_2 = arith.constant 0 : i32
    return %arg0, %arg1, %c0_i32, %c0_i32_0, %c0_i32_1 : i32, i32, i32, i32, i32
  }
  func.func @transform_1(%arg0: i32, %arg1: i32, %arg2: i32) -> (i32, i32, i32, i32, i32) {
    %0 = arith.minsi %arg2, %arg1 : i32
    %c1_i32 = arith.constant 1 : i32
    %c0_i32 = arith.constant 0 : i32
    %c0_i32_0 = arith.constant 0 : i32
    %c0_i32_1 = arith.constant 0 : i32
    return %arg0, %0, %c1_i32, %c0_i32, %c0_i32_0 : i32, i32, i32, i32, i32
  }
  func.func @transform_2(%arg0: i32, %arg1: i32, %arg2: i32) -> (i32, i32, i32, i32) {
    %0 = arith.minsi %arg2, %arg1 : i32
    %c0_i32 = arith.constant 0 : i32
    %c0_i32_0 = arith.constant 0 : i32
    %c0_i32_1 = arith.constant 0 : i32
    return %arg0, %0, %c0_i32, %c0_i32_0 : i32, i32, i32, i32
  }
  func.func @transform_3(%arg0: i32, %arg1: i32, %arg2: i32) -> (i32, i32, i32) {
    %c0_i32 = arith.constant 0 : i32
    %c0_i32_0 = arith.constant 0 : i32
    return %arg0, %arg1, %c0_i32 : i32, i32, i32
  }
  func.func @transform_4(%arg0: i32, %arg1: i32, %arg2: i32) -> (i32, i32, i32, i32) {
    %c0_i32 = arith.constant 0 : i32
    %c0_i32_0 = arith.constant 0 : i32
    %c0_i32_1 = arith.constant 0 : i32
    return %arg0, %arg1, %c0_i32, %c0_i32_0 : i32, i32, i32, i32
  }
}

</mosaic_0001>

<llo_original>
// kernel: tpu_custom_call.1
$region0: #{tpu_custom_call.1}
  #allocation0 [shape = 'u32[]', space=smem, size = 0x4, offset = 0x4, fixed_abs, tag = 'smem constant byte address 0x4 - core index']
  #allocation1 [shape = 'u32[144,128]{1,0:T(1,128)}', space=vmem, size = 0x12000, scoped, tag = 'internal scratch']
  #allocation2 [shape = 'f32[8,2,32]{2,1,0:T(2,128)}', space=vmem, size = 0x2000, scoped, tag = 'scratch operand']
  %s0 = inlined_call_operand.hbm [shape: f32[2,16,2,2,32], index: 0, kind: input, shape index: {}]
  %s1 = inlined_call_operand.hbm [shape: f32[2,16,2,2,32], index: 1, kind: input, shape index: {}]
  %s2 = inlined_call_operand.hbm [shape: f32[2,16,2,32], index: 2, kind: input, shape index: {}]
  %s3 = inlined_call_operand.vmem [shape: f32[2,16,2], index: 3, kind: input, shape index: {}]
  %s4 = inlined_call_operand.hbm [shape: f32[2,16,2,32], index: 4, kind: output, shape index: {}]
  %s5 = sld [smem:[#allocation0]]
  $region73: #{tpu_custom_call.1} parent=0
    _
  %s7 = ssub.s32 1, %s5
  %s8 = scalar_select 0, %s7, %s5
  $region1: #{tpu_custom_call.1} parent=0
    #allocation3 [shape = 'u8[16384]{0}', space=vmem, size = 0x4000, scoped, tag = 'input window, operand 0']
    #allocation4 [shape = 's32[2]{0}', space=sflag, size = 0x8, scoped, tag = 'scoped memory for tpu_custom_call.1']
    #allocation5 [shape = 's32[2]{0}', space=sflag, size = 0x8, scoped, tag = 'scoped memory for tpu_custom_call.1']
    #allocation6 [shape = 'u8[16384]{0}', space=vmem, size = 0x4000, scoped, tag = 'input window, operand 1']
    #allocation7 [shape = 's32[2]{0}', space=sflag, size = 0x8, scoped, tag = 'scoped memory for tpu_custom_call.1']
    #allocation8 [shape = 'u8[16384]{0}', space=vmem, size = 0x4000, scoped, tag = 'input window, operand 2']
    #allocation9 [shape = 'u8[16384]{0}', space=vmem, size = 0x4000, scoped, tag = 'output window, operand 0']
    %9 = vsyncpa [#allocation4], 0
    %s10 = scalar_lea.sflag [#allocation4], 1
    %11 = vsyncpa %s10, 0
    %12 = vsyncpa [#allocation7], 0
    %s13 = scalar_lea.sflag [#allocation7], 1
    %14 = vsyncpa %s13, 0
    %15 = vsyncpa [#allocation5], 0
    %s16 = scalar_lea.sflag [#allocation5], 1
    %17 = vsyncpa %s16, 0
    loop: start=0, step=1, limit=10
    $region2: #{tpu_custom_call.1} parent=1 // loop_pre_header
      _
    $region3: #{tpu_custom_call.1} parent=1 // loop_header
      %s19 = sphi 0, %s23
      %p20 = scmp.ge.s32.totalorder %s19, 10
      %s26 = sphi 0, %s45
      %s27 = sphi 0, %s41
      %s28 = sphi 0, %s37
      %s29 = sphi 0, %s26
      %s30 = sphi 0, %s27
      %s31 = sphi 0, %s28
      %s32 = sphi 0, %s29
      %s33 = sphi 0, %s30
      %s34 = sphi 0, %s31
      %s50 = sphi 0, %s52
      %s53 = sphi 0, %s50
      %s54 = sphi 0, %s53
      %s70 = sphi 0, %s54
      %s82 = sphi 0, %s84
      %s85 = sphi 0, %s82
      %s86 = sphi 0, %s85
      %s102 = sphi 0, %s86
      %s114 = sphi 0, %s116
      %s117 = sphi 0, %s114
      %s118 = sphi 0, %s117
      %s134 = sphi 0, %s118
      %s142 = sphi 0, %s144
      %s145 = sphi 0, %s142
      %s146 = sphi 0, %s145
      %s162 = sphi 0, %s146
      %s170 = sphi 0, %s172
      %s173 = sphi 0, %s170
      %s174 = sphi 0, %s173
      %s190 = sphi 0, %s174
    $region4: #{tpu_custom_call.1} parent=1 // loop_header_branch
      %22 = sbr.rel (%p20) target = $region8
    $region5: #{tpu_custom_call.1} parent=1 // loop_body
      %s24 = ssub.s32 %s19, 1
      %s25 = ssub.s32 %s19, 2
      %s35 = sadd.s32 1, %s28
      %p36 = scmp.ge.s32.totalorder %s35, 2
      %s37 = scalar_select %p36, 0, %s35
      %s38 = sadd.s32 1, %s27
      %s39 = scalar_select %p36, %s38, %s27
      %p40 = scmp.ge.s32.totalorder %s39, 2
      %s41 = scalar_select %p40, 0, %s39
      %s42 = sadd.s32 1, %s26
      %s43 = scalar_select %p40, %s42, %s26
      %p44 = scmp.ge.s32.totalorder %s43, 2
      %s45 = scalar_select %p44, 0, %s43
      %s46 = ssub.s32 %s26, %s45
      %s47 = ssub.s32 %s27, %s41
      %s48 = sor.u32 %s46, %s47
      %p49 = scmp.eq.s32.totalorder %s48, 0
      %s51 = sadd.s32 %s50, 1
      %s52 = scalar_select %p49, %s50, %s51
      %p55 = pneg %p49
      %p56 = scmp.eq.s32.totalorder %s19, 7
      %p57 = por %p55, %p56
      %p58 = scmp.ne.s32.totalorder %s50, %s53
      %p59 = scmp.eq.s32.totalorder %s19, 0
      %p60 = por %p58, %p59
      %p61 = scmp.ne.s32.totalorder %s50, %s53
      %p62 = scmp.eq.s32.totalorder %s24, 7
      %p63 = por %p61, %p62
      %p64 = scmp.ne.s32.totalorder %s53, %s54
      %p65 = scmp.eq.s32.totalorder %s24, 0
      %p66 = por %p64, %p65
      %p67 = scmp.ne.s32.totalorder %s53, %s54
      %p68 = scmp.eq.s32.totalorder %s25, 7
      %p69 = por %p67, %p68
      %p71 = scmp.ne.s32.totalorder %s54, %s70
      %p72 = scmp.eq.s32.totalorder %s25, 0
      %p73 = por %p71, %p72
      %p74 = scmp.lt.s32.totalorder %s28, %s27
      %s75 = scalar_select %p74, %s28, %s27
      %p76 = scmp.lt.s32.totalorder %s37, %s41
      %s77 = scalar_select %p76, %s37, %s41
      %s78 = ssub.s32 %s26, %s45
      %s79 = ssub.s32 %s75, %s77
      %s80 = sor.u32 %s78, %s79
      %p81 = scmp.eq.s32.totalorder %s80, 0
      %s83 = sadd.s32 %s82, 1
      %s84 = scalar_select %p81, %s82, %s83
      %p87 = pneg %p81
      %p88 = scmp.eq.s32.totalorder %s19, 7
      %p89 = por %p87, %p88
      %p90 = scmp.ne.s32.totalorder %s82, %s85
      %p91 = scmp.eq.s32.totalorder %s19, 0
      %p92 = por %p90, %p91
      %p93 = scmp.ne.s32.totalorder %s82, %s85
      %p94 = scmp.eq.s32.totalorder %s24, 7
      %p95 = por %p93, %p94
      %p96 = scmp.ne.s32.totalorder %s85, %s86
      %p97 = scmp.eq.s32.totalorder %s24, 0
      %p98 = por %p96, %p97
      %p99 = scmp.ne.s32.totalorder %s85, %s86
      %p100 = scmp.eq.s32.totalorder %s25, 7
      %p101 = por %p99, %p100
      %p103 = scmp.ne.s32.totalorder %s86, %s102
      %p104 = scmp.eq.s32.totalorder %s25, 0
      %p105 = por %p103, %p104
      %p106 = scmp.lt.s32.totalorder %s28, %s27
      %s107 = scalar_select %p106, %s28, %s27
      %p108 = scmp.lt.s32.totalorder %s37, %s41
      %s109 = scalar_select %p108, %s37, %s41
      %s110 = ssub.s32 %s26, %s45
      %s111 = ssub.s32 %s107, %s109
      %s112 = sor.u32 %s110, %s111
      %p113 = scmp.eq.s32.totalorder %s112, 0
      %s115 = sadd.s32 %s114, 1
      %s116 = scalar_select %p113, %s114, %s115
      %p119 = pneg %p113
      %p120 = scmp.eq.s32.totalorder %s19, 7
      %p121 = por %p119, %p120
      %p122 = scmp.ne.s32.totalorder %s114, %s117
      %p123 = scmp.eq.s32.totalorder %s19, 0
      %p124 = por %p122, %p123
      %p125 = scmp.ne.s32.totalorder %s114, %s117
      %p126 = scmp.eq.s32.totalorder %s24, 7
      %p127 = por %p125, %p126
      %p128 = scmp.ne.s32.totalorder %s117, %s118
      %p129 = scmp.eq.s32.totalorder %s24, 0
      %p130 = por %p128, %p129
      %p131 = scmp.ne.s32.totalorder %s117, %s118
      %p132 = scmp.eq.s32.totalorder %s25, 7
      %p133 = por %p131, %p132
      %p135 = scmp.ne.s32.totalorder %s118, %s134
      %p136 = scmp.eq.s32.totalorder %s25, 0
      %p137 = por %p135, %p136
      %s138 = ssub.s32 %s26, %s45
      %s139 = ssub.s32 %s27, %s41
      %s140 = sor.u32 %s138, %s139
      %p141 = scmp.eq.s32.totalorder %s140, 0
      %s143 = sadd.s32 %s142, 1
      %s144 = scalar_select %p141, %s142, %s143
      %p147 = pneg %p141
      %p148 = scmp.eq.s32.totalorder %s19, 7
      %p149 = por %p147, %p148
      %p150 = scmp.ne.s32.totalorder %s142, %s145
      %p151 = scmp.eq.s32.totalorder %s19, 0
      %p152 = por %p150, %p151
      %p153 = scmp.ne.s32.totalorder %s142, %s145
      %p154 = scmp.eq.s32.totalorder %s24, 7
      %p155 = por %p153, %p154
      %p156 = scmp.ne.s32.totalorder %s145, %s146
      %p157 = scmp.eq.s32.totalorder %s24, 0
      %p158 = por %p156, %p157
      %p159 = scmp.ne.s32.totalorder %s145, %s146
      %p160 = scmp.eq.s32.totalorder %s25, 7
      %p161 = por %p159, %p160
      %p163 = scmp.ne.s32.totalorder %s146, %s162
      %p164 = scmp.eq.s32.totalorder %s25, 0
      %p165 = por %p163, %p164
      %s166 = ssub.s32 %s26, %s45
      %s167 = ssub.s32 %s27, %s41
      %s168 = sor.u32 %s166, %s167
      %p169 = scmp.eq.s32.totalorder %s168, 0
      %s171 = sadd.s32 %s170, 1
      %s172 = scalar_select %p169, %s170, %s171
      %p175 = pneg %p169
      %p176 = scmp.eq.s32.totalorder %s19, 7
      %p177 = por %p175, %p176
      %p178 = scmp.ne.s32.totalorder %s170, %s173
      %p179 = scmp.eq.s32.totalorder %s19, 0
      %p180 = por %p178, %p179
      %p181 = scmp.ne.s32.totalorder %s170, %s173
      %p182 = scmp.eq.s32.totalorder %s24, 7
      %p183 = por %p181, %p182
      %p184 = scmp.ne.s32.totalorder %s173, %s174
      %p185 = scmp.eq.s32.totalorder %s24, 0
      %p186 = por %p184, %p185
      %p187 = scmp.ne.s32.totalorder %s173, %s174
      %p188 = scmp.eq.s32.totalorder %s25, 7
      %p189 = por %p187, %p188
      %p191 = scmp.ne.s32.totalorder %s174, %s190
      %p192 = scmp.eq.s32.totalorder %s25, 0
      %p193 = por %p191, %p192
      %p194 = scmp.le.s32.totalorder 1, %s19
      %p195 = scmp.lt.s32.totalorder %s19, 9
      %p196 = pnand %p194, %p195
      %p197 = pneg %p196
      // Predicated region
      $region9: #{tpu_custom_call.1} parent=5 // pred_check
        _
      $region10: #{tpu_custom_call.1} parent=5 // pred_check_branch
        %199 = sbr.rel (%p196) target = $region12
      $region11: #{tpu_custom_call.1} parent=5 // pred_region
        %s200 = ssub.s32 %s19, 1
      $region12: #{tpu_custom_call.1} parent=5 // pred_fallthru
        _
      %p201 = scmp.lt.s32.totalorder %s19, 8
      // Predicated region
      $region13: #{tpu_custom_call.1} parent=5 // pred_check
        %p202 = pneg %p201
      $region14: #{tpu_custom_call.1} parent=5 // pred_check_branch
        %204 = sbr.rel (%p202) target = $region16
      $region15: #{tpu_custom_call.1} parent=5 // pred_region
        // Predicated region
        $region17: #{tpu_custom_call.1} parent=15 // pred_check
          %p205 = pneg %p60
        $region18: #{tpu_custom_call.1} parent=15 // pred_check_branch
          %207 = sbr.rel (%p205) target = $region20
        $region19: #{tpu_custom_call.1} parent=15 // pred_region
          %s208 = sand.u32 %s50, 1
          %s209 = scalar_lea.sflag [#allocation4], %s208
          %s210 = sand.u32 %s50, 1
          %s211 = smul.addr %s210, 16
          %s212 = scalar_lea.vmem [#allocation3], %s211
          %s213 = smul.u32 8, %s27
          %s215 = ssub.s32 256, 256
          %216 = vsyncadd %s209, %s215
          %s217 = smul.addr %s213, 2
          %s218 = smul.addr %s26, 32
          %s219 = sadd.s32 %s217, %s218
          %s220 = smul.addr %s219, 32
          %s221 = scalar_lea.hbm %s0, %s220
          %s222 = sshll.u32 %s212, 4
          %s223 = int_to_ptr.vmem [resolvable:$true] %s222
          %228 = dma.hbm_to_vmem [thread:$0]  %s221, 256, %s223, %s209, 64, 32, 2
        $region20: #{tpu_custom_call.1} parent=15 // pred_fallthru
          _
        // Predicated region
        $region21: #{tpu_custom_call.1} parent=15 // pred_check
          %p229 = pneg %p92
        $region22: #{tpu_custom_call.1} parent=15 // pred_check_branch
          %231 = sbr.rel (%p229) target = $region24
        $region23: #{tpu_custom_call.1} parent=15 // pred_region
          %s232 = sand.u32 %s19, 1
          %s233 = scalar_lea.sflag [#allocation7], %s232
          %s234 = sand.u32 %s82, 1
          %s235 = smul.addr %s234, 16
          %s236 = scalar_lea.vmem [#allocation6], %s235
          %p237 = scmp.lt.s32.totalorder %s28, %s27
          %s238 = scalar_select %p237, %s28, %s27
          %s239 = smul.u32 8, %s238
          %s241 = ssub.s32 256, 256
          %242 = vsyncadd %s233, %s241
          %s243 = smul.addr %s239, 2
          %s244 = sadd.s32 1, %s243
          %s245 = smul.addr %s26, 32
          %s246 = sadd.s32 %s244, %s245
          %s247 = smul.addr %s246, 32
          %s248 = scalar_lea.hbm %s1, %s247
          %s249 = sshll.u32 %s236, 4
          %s250 = int_to_ptr.vmem [resolvable:$true] %s249
          %255 = dma.hbm_to_vmem [thread:$0]  %s248, 256, %s250, %s233, 64, 32, 2
        $region24: #{tpu_custom_call.1} parent=15 // pred_fallthru
          _
        // Predicated region
        $region25: #{tpu_custom_call.1} parent=15 // pred_check
          %p256 = pneg %p124
        $region26: #{tpu_custom_call.1} parent=15 // pred_check_branch
          %258 = sbr.rel (%p256) target = $region28
        $region27: #{tpu_custom_call.1} parent=15 // pred_region
          %s259 = sand.u32 %s19, 1
          %s260 = scalar_lea.sflag [#allocation7], %s259
          %s261 = sand.u32 %s114, 1
          %s262 = smul.addr %s261, 16
          %s263 = scalar_lea.vmem [#allocation8], %s262
          %p264 = scmp.lt.s32.totalorder %s28, %s27
          %s265 = scalar_select %p264, %s28, %s27
          %s266 = smul.u32 8, %s265
          %s268 = ssub.s32 256, 256
          %269 = vsyncadd %s260, %s268
          %s270 = smul.addr %s26, 16
          %s271 = sadd.s32 %s266, %s270
          %s272 = smul.addr %s271, 32
          %s273 = scalar_lea.hbm %s2, %s272
          %s274 = sshll.u32 %s263, 4
          %s275 = int_to_ptr.vmem [resolvable:$true] %s274
          %280 = dma.hbm_to_vmem [thread:$0]  %s273, 256, %s275, %s260, 32, 32, 2
        $region28: #{tpu_custom_call.1} parent=15 // pred_fallthru
          _
        // Predicated region
        $region29: #{tpu_custom_call.1} parent=15 // pred_check
          %p281 = pneg %p152
        $region30: #{tpu_custom_call.1} parent=15 // pred_check_branch
          %283 = sbr.rel (%p281) target = $region32
        $region31: #{tpu_custom_call.1} parent=15 // pred_region
          %p284 = scmp.lt.s32.totalorder %s26, 1
          %s285 = scalar_select %p284, %s26, 1
          %p286 = scmp.lt.s32.totalorder %s27, 1
          %s287 = scalar_select %p286, %s27, 1
          %s288 = smul.addr %s285, 2
          %s289 = sadd.s32 %s287, %s288
          %s290 = smul.addr %s289, 8
          %s291 = scalar_lea.vmem %s3, %s290
        $region32: #{tpu_custom_call.1} parent=15 // pred_fallthru
          _
      $region16: #{tpu_custom_call.1} parent=5 // pred_fallthru
        _
      %p292 = scmp.le.s32.totalorder 1, %s19
      %p293 = scmp.lt.s32.totalorder %s19, 9
      %p294 = pnand %p292, %p293
      %p295 = pneg %p294
      // Predicated region
      $region33: #{tpu_custom_call.1} parent=5 // pred_check
        _
      $region34: #{tpu_custom_call.1} parent=5 // pred_check_branch
        %297 = sbr.rel (%p294) target = $region36
      $region35: #{tpu_custom_call.1} parent=5 // pred_region
        %s298 = ssub.s32 %s19, 1
        %s299 = sand.u32 %s53, 1
        %s300 = scalar_lea.sflag [#allocation4], %s299
        %s301 = sand.u32 %s53, 1
        %s302 = smul.addr %s301, 16
        %s303 = scalar_lea.vmem [#allocation3], %s302
        // Predicated region
        $region37: #{tpu_custom_call.1} parent=35 // pred_check
          %p304 = pneg %p66
        $region38: #{tpu_custom_call.1} parent=35 // pred_check_branch
          %306 = sbr.rel (%p304) target = $region40
        $region39: #{tpu_custom_call.1} parent=35 // pred_region
          %307 = dma.done %s300, 256
        $region40: #{tpu_custom_call.1} parent=35 // pred_fallthru
          _
        %s308 = sand.u32 %s24, 1
        %s309 = scalar_lea.sflag [#allocation7], %s308
        %s310 = sand.u32 %s85, 1
        %s311 = smul.addr %s310, 16
        %s312 = scalar_lea.vmem [#allocation6], %s311
        // Predicated region
        $region41: #{tpu_custom_call.1} parent=35 // pred_check
          %p313 = pneg %p98
        $region42: #{tpu_custom_call.1} parent=35 // pred_check_branch
          %315 = sbr.rel (%p313) target = $region44
        $region43: #{tpu_custom_call.1} parent=35 // pred_region
          %316 = dma.done %s309, 256
        $region44: #{tpu_custom_call.1} parent=35 // pred_fallthru
          _
        %s317 = sand.u32 %s24, 1
        %s318 = scalar_lea.sflag [#allocation7], %s317
        %s319 = sand.u32 %s117, 1
        %s320 = smul.addr %s319, 16
        %s321 = scalar_lea.vmem [#allocation8], %s320
        // Predicated region
        $region45: #{tpu_custom_call.1} parent=35 // pred_check
          %p322 = pneg %p130
        $region46: #{tpu_custom_call.1} parent=35 // pred_check_branch
          %324 = sbr.rel (%p322) target = $region48
        $region47: #{tpu_custom_call.1} parent=35 // pred_region
          %325 = dma.done %s318, 256
        $region48: #{tpu_custom_call.1} parent=35 // pred_fallthru
          _
        %s326 = sand.u32 %s53, 1
        %s327 = scalar_lea.sflag [#allocation4], %s326
        %s328 = sand.u32 %s53, 1
        %s329 = smul.addr %s328, 16
        %s330 = scalar_lea.vmem [#allocation3], %s329
        %p331 = pneg %p66
        %p332 = pneg %p63
        %s333 = sand.u32 %s24, 1
        %s334 = scalar_lea.sflag [#allocation7], %s333
        %s335 = sand.u32 %s85, 1
        %s336 = smul.addr %s335, 16
        %s337 = scalar_lea.vmem [#allocation6], %s336
        %p338 = pneg %p98
        %p339 = pneg %p95
        %s340 = sand.u32 %s24, 1
        %s341 = scalar_lea.sflag [#allocation7], %s340
        %s342 = sand.u32 %s117, 1
        %s343 = smul.addr %s342, 16
        %s344 = scalar_lea.vmem [#allocation8], %s343
        %p345 = pneg %p130
        %p346 = pneg %p127
        %p347 = scmp.lt.s32.totalorder %s29, 1
        %s348 = scalar_select %p347, %s29, 1
        %p349 = scmp.lt.s32.totalorder %s30, 1
        %s350 = scalar_select %p349, %s30, 1
        %s351 = smul.addr %s348, 2
        %s352 = sadd.s32 %s350, %s351
        %s353 = smul.addr %s352, 8
        %s354 = scalar_lea.vmem %s3, %s353
        %p355 = pneg %p158
        %p356 = pneg %p155
        %p357 = pneg %p186
        %p358 = pneg %p183
        %s359 = sand.u32 %s173, 1
        %s360 = scalar_lea.sflag [#allocation5], %s359
        %s361 = sand.u32 %s173, 1
        %s362 = smul.addr %s361, 16
        %s363 = scalar_lea.vmem [#allocation9], %s362
        %s364 = smul.u32 8, %s30
        %p365 = scmp.lt.s32.totalorder %s31, %s30
        %s366 = scalar_select %p365, %s31, %s30
        %s367 = smul.u32 8, %s366
        %p368 = scmp.lt.s32.totalorder %s31, %s30
        %s369 = scalar_select %p368, %s31, %s30
        %s370 = smul.u32 8, %s369
        %p371 = scmp.lt.s32.totalorder %s29, 1
        %s372 = scalar_select %p371, %s29, 1
        %p373 = scmp.lt.s32.totalorder %s30, 1
        %s374 = scalar_select %p373, %s30, 1
        %s375 = smul.addr %s372, 2
        %s376 = sadd.s32 %s374, %s375
        %s377 = smul.addr %s376, 8
        %s378 = scalar_lea.vmem %s3, %s377
        %s379 = smul.u32 8, %s30
        %p380 = scmp.eq.s32.totalorder %s31, 0
        // Predicated region
        $region49: #{tpu_custom_call.1} parent=35 // pred_check
          %p381 = pneg %p380
        $region50: #{tpu_custom_call.1} parent=35 // pred_check_branch
          %383 = sbr.rel (%p381) target = $region52
        $region51: #{tpu_custom_call.1} parent=35 // pred_region
          %vm384 = vcmask 254976
          %385 = vst.msk [vmem:[#allocation2] sm:$0x3] %vm384, 0.0
          %386 = vst.msk [vmem:[#allocation2 + $0x2] sm:$0x3] %vm384, 0.0
          %387 = vst.msk [vmem:[#allocation2 + $0x4] sm:$0x3] %vm384, 0.0
          %388 = vst.msk [vmem:[#allocation2 + $0x6] sm:$0x3] %vm384, 0.0
          %389 = vst.msk [vmem:[#allocation2 + $0x8] sm:$0x3] %vm384, 0.0
          %390 = vst.msk [vmem:[#allocation2 + $0xa] sm:$0x3] %vm384, 0.0
          %391 = vst.msk [vmem:[#allocation2 + $0xc] sm:$0x3] %vm384, 0.0
          %392 = vst.msk [vmem:[#allocation2 + $0xe] sm:$0x3] %vm384, 0.0
        $region52: #{tpu_custom_call.1} parent=35 // pred_fallthru
          _
        %p393 = scmp.le.s32.totalorder %s31, %s30
        // Predicated region
        $region53: #{tpu_custom_call.1} parent=35 // pred_check
          %p394 = pneg %p393
        $region54: #{tpu_custom_call.1} parent=35 // pred_check_branch
          %396 = sbr.rel (%p394) target = $region56
        $region55: #{tpu_custom_call.1} parent=35 // pred_region
          %v397 = vlaneseq
          %v398 = vshrl.u32 %v397, 7
          %v399 = vlaneseq
          %v400 = vand.u32 %v399, 127
          %p401 = scmp.ne.s32.totalorder %s31, %s30
          %vm402 = vcmp.le.s32.totalorder %v400, %v398
          %s403 = scalar_select %p401, 1, 0
          %v404 = vstv %s403
          %vm405 = vcmp.eq.s32.totalorder %v404, 1
          %vm406 = vmor %vm405, %vm402
          %v407 = vld [vmem:[%s303] sm:$0x1]
          %v408 = vld [vmem:[%s303 + $0x2] sm:$0x1]
          %v409 = vld [vmem:[%s303 + $0x4] sm:$0x1]
          %v410 = vld [vmem:[%s303 + $0x6] sm:$0x1]
          %v411 = vld [vmem:[%s303 + $0x8] sm:$0x1]
          %v412 = vld [vmem:[%s303 + $0xa] sm:$0x1]
          %v413 = vld [vmem:[%s303 + $0xc] sm:$0x1]
          %v414 = vld [vmem:[%s303 + $0xe] sm:$0x1]
          %v415 = vld [vmem:[%s312] sm:$0x1]
          %v416 = vld [vmem:[%s312 + $0x2] sm:$0x1]
          %v417 = vld [vmem:[%s312 + $0x4] sm:$0x1]
          %v418 = vld [vmem:[%s312 + $0x6] sm:$0x1]
          %v419 = vld [vmem:[%s312 + $0x8] sm:$0x1]
          %v420 = vld [vmem:[%s312 + $0xa] sm:$0x1]
          %v421 = vld [vmem:[%s312 + $0xc] sm:$0x1]
          %v422 = vld [vmem:[%s312 + $0xe] sm:$0x1]
          %v423 = vld [vmem:[%s321] sm:$0x1]
          %v424 = vld [vmem:[%s321 + $0x2] sm:$0x1]
          %v425 = vld [vmem:[%s321 + $0x4] sm:$0x1]
          %v426 = vld [vmem:[%s321 + $0x6] sm:$0x1]
          %v427 = vld [vmem:[%s321 + $0x8] sm:$0x1]
          %v428 = vld [vmem:[%s321 + $0xa] sm:$0x1]
          %v429 = vld [vmem:[%s321 + $0xc] sm:$0x1]
          %v430 = vld [vmem:[%s321 + $0xe] sm:$0x1]
          %v439 = vrot.slane %v408, 7
          %vm440 = vcmask 1041409
          %v441 = vsel %vm440, %v439, %v407
          %v442 = vrot.slane %v409, 6
          %vm443 = vcmask 1042434
          %v444 = vsel %vm443, %v442, %v441
          %v445 = vrot.slane %v410, 5
          %vm446 = vcmask 1043459
          %v447 = vsel %vm446, %v445, %v444
          %v448 = vrot.slane %v411, 4
          %vm449 = vcmask 1044484
          %v450 = vsel %vm449, %v448, %v447
          %v451 = vrot.slane %v412, 3
          %vm452 = vcmask 1045509
          %v453 = vsel %vm452, %v451, %v450
          %v454 = vrot.slane %v413, 2
          %vm455 = vcmask 1046534
          %v456 = vsel %vm455, %v454, %v453
          %v457 = vrot.slane %v414, 1
          %vm458 = vcmask 1047559
          %v459 = vsel %vm458, %v457, %v456
          %v468 = vrot.slane %v416, 7
          %v469 = vsel %vm440, %v468, %v415
          %v470 = vrot.slane %v417, 6
          %v471 = vsel %vm443, %v470, %v469
          %v472 = vrot.slane %v418, 5
          %v473 = vsel %vm446, %v472, %v471
          %v474 = vrot.slane %v419, 4
          %v475 = vsel %vm449, %v474, %v473
          %v476 = vrot.slane %v420, 3
          %v477 = vsel %vm452, %v476, %v475
          %v478 = vrot.slane %v421, 2
          %v479 = vsel %vm455, %v478, %v477
          %v480 = vrot.slane %v422, 1
          %v481 = vsel %vm458, %v480, %v479
          %vm482 = vcmask 261120
          %v483 = vsel %vm482, %v459, 0
          %v485 = vsel %vm482, %v481, 0
          %487 = vmatprep.subr.mxu0 0.0
          %488 = vmatpush1.xpose.msra.mxu0 0.0
          %489 = vmatprep.subr.mxu0 0.0
          %490 = vmatpush1.xpose.msra.mxu0 0.0
          %491 = vmatprep.subr.mxu0 0.0
          %492 = vmatpush1.xpose.msra.mxu0 0.0
          %493 = vmatprep.subr.mxu0 0.0
          %494 = vmatpush1.xpose.msra.mxu0 0.0
          %495 = vmatprep.subr.mxu0 0.0
          %496 = vmatpush1.xpose.msra.mxu0 0.0
          %497 = vmatprep.subr.mxu0 0.0
          %498 = vmatpush1.xpose.msra.mxu0 0.0
          %499 = vmatprep.subr.mxu0 0.0
          %500 = vmatpush1.xpose.msra.mxu0 0.0
          %501 = vmatprep.subr.mxu0 0.0
          %502 = vmatpush1.xpose.msra.mxu0 0.0
          %503 = vmatprep.subr.mxu0 0.0
          %504 = vmatpush1.xpose.msra.mxu0 0.0
          %505 = vmatprep.subr.mxu0 0.0
          %506 = vmatpush1.xpose.msra.mxu0 0.0
          %507 = vmatprep.subr.mxu0 0.0
          %508 = vmatpush1.xpose.msra.mxu0 0.0
          %509 = vmatprep.subr.mxu0 0.0
          %510 = vmatpush1.xpose.msra.mxu0 0.0
          %511 = vmatprep.subr.mxu0 0.0
          %512 = vmatpush1.xpose.msra.mxu0 0.0
          %513 = vmatprep.subr.mxu0 0.0
          %514 = vmatpush1.xpose.msra.mxu0 0.0
          %515 = vmatprep.subr.mxu0 0.0
          %516 = vmatpush1.xpose.msra.mxu0 0.0
          %517 = vmatprep.subr.mxu0 0.0
          %518 = vmatpush1.xpose.msra.mxu0 %v485
          %519 = vmatprep.subr.mxu0 0.0
          %520 = vmatpush2.xpose.msra.mxu0 0.0
          %521 = vmatprep.subr.mxu0 0.0
          %522 = vmatpush2.xpose.msra.mxu0 0.0
          %523 = vmatprep.subr.mxu0 0.0
          %524 = vmatpush2.xpose.msra.mxu0 0.0
          %525 = vmatprep.subr.mxu0 0.0
          %526 = vmatpush2.xpose.msra.mxu0 0.0
          %527 = vmatprep.subr.mxu0 0.0
          %528 = vmatpush2.xpose.msra.mxu0 0.0
          %529 = vmatprep.subr.mxu0 0.0
          %530 = vmatpush2.xpose.msra.mxu0 0.0
          %531 = vmatprep.subr.mxu0 0.0
          %532 = vmatpush2.xpose.msra.mxu0 0.0
          %533 = vmatprep.subr.mxu0 0.0
          %534 = vmatpush2.xpose.msra.mxu0 0.0
          %535 = vmatprep.subr.mxu0 0.0
          %536 = vmatpush2.xpose.msra.mxu0 0.0
          %537 = vmatprep.subr.mxu0 0.0
          %538 = vmatpush2.xpose.msra.mxu0 0.0
          %539 = vmatprep.subr.mxu0 0.0
          %540 = vmatpush2.xpose.msra.mxu0 0.0
          %541 = vmatprep.subr.mxu0 0.0
          %542 = vmatpush2.xpose.msra.mxu0 0.0
          %543 = vmatprep.subr.mxu0 0.0
          %544 = vmatpush2.xpose.msra.mxu0 0.0
          %545 = vmatprep.subr.mxu0 0.0
          %546 = vmatpush2.xpose.msra.mxu0 0.0
          %547 = vmatprep.subr.mxu0 0.0
          %548 = vmatpush2.xpose.msra.mxu0 0.0
          %549 = vmatprep.subr.mxu0 0.0
          %550 = vmatpush2.xpose.msra.mxu0 0.0
          %551 = vmatprep.mubr.f32.mxu0 0.0
          %552 = vmatmul.mubr.f32.gmra.mxu0 %v483
          %v553 = vpop.f32.mrf.mxu0
          %v554 = vadd.f32 0.0, %v553
          %v555 = vpop.f32.mrf.mxu0
          %556 = vdwg.mxu0
          %v557 = vsel %vm406, %v554, 0.0
          %v558 = vld [vmem:[#allocation2] sm:$0x1]
          %v559 = vld [vmem:[#allocation2 + $0x2] sm:$0x1]
          %v560 = vld [vmem:[#allocation2 + $0x4] sm:$0x1]
          %v561 = vld [vmem:[#allocation2 + $0x6] sm:$0x1]
          %v562 = vld [vmem:[#allocation2 + $0x8] sm:$0x1]
          %v563 = vld [vmem:[#allocation2 + $0xa] sm:$0x1]
          %v564 = vld [vmem:[#allocation2 + $0xc] sm:$0x1]
          %v565 = vld [vmem:[#allocation2 + $0xe] sm:$0x1]
          %v574 = vrot.slane %v424, 7
          %v575 = vsel %vm440, %v574, %v423
          %v576 = vrot.slane %v425, 6
          %v577 = vsel %vm443, %v576, %v575
          %v578 = vrot.slane %v426, 5
          %v579 = vsel %vm446, %v578, %v577
          %v580 = vrot.slane %v427, 4
          %v581 = vsel %vm449, %v580, %v579
          %v582 = vrot.slane %v428, 3
          %v583 = vsel %vm452, %v582, %v581
          %v584 = vrot.slane %v429, 2
          %v585 = vsel %vm455, %v584, %v583
          %v586 = vrot.slane %v430, 1
          %v587 = vsel %vm458, %v586, %v585
          %vm589 = vcmask 64512
          %v591 = vsel %vm589, %v557, 0
          %593 = vmatprep.subr.mxu0 0.0
          %594 = vmatpush1.msra.mxu0 0.0
          %595 = vmatprep.subr.mxu0 0.0
          %596 = vmatpush1.msra.mxu0 0.0
          %597 = vmatprep.subr.mxu0 0.0
          %598 = vmatpush1.msra.mxu0 0.0
          %599 = vmatprep.subr.mxu0 0.0
          %600 = vmatpush1.msra.mxu0 0.0
          %601 = vmatprep.subr.mxu0 0.0
          %602 = vmatpush1.msra.mxu0 0.0
          %603 = vmatprep.subr.mxu0 0.0
          %604 = vmatpush1.msra.mxu0 0.0
          %605 = vmatprep.subr.mxu0 0.0
          %606 = vmatpush1.msra.mxu0 0.0
          %607 = vmatprep.subr.mxu0 0.0
          %608 = vmatpush1.msra.mxu0 0.0
          %609 = vmatprep.subr.mxu0 0.0
          %610 = vmatpush1.msra.mxu0 0.0
          %611 = vmatprep.subr.mxu0 0.0
          %612 = vmatpush1.msra.mxu0 0.0
          %613 = vmatprep.subr.mxu0 0.0
          %614 = vmatpush1.msra.mxu0 0.0
          %615 = vmatprep.subr.mxu0 0.0
          %616 = vmatpush1.msra.mxu0 0.0
          %617 = vmatprep.subr.mxu0 0.0
          %618 = vmatpush1.msra.mxu0 0.0
          %619 = vmatprep.subr.mxu0 0.0
          %620 = vmatpush1.msra.mxu0 0.0
          %621 = vmatprep.subr.mxu0 0.0
          %622 = vmatpush1.msra.mxu0 0.0
          %623 = vmatprep.subr.mxu0 0.0
          %624 = vmatpush1.msra.mxu0 %v587
          %625 = vmatprep.subr.mxu0 0.0
          %626 = vmatpush2.msra.mxu0 0.0
          %627 = vmatprep.subr.mxu0 0.0
          %628 = vmatpush2.msra.mxu0 0.0
          %629 = vmatprep.subr.mxu0 0.0
          %630 = vmatpush2.msra.mxu0 0.0
          %631 = vmatprep.subr.mxu0 0.0
          %632 = vmatpush2.msra.mxu0 0.0
          %633 = vmatprep.subr.mxu0 0.0
          %634 = vmatpush2.msra.mxu0 0.0
          %635 = vmatprep.subr.mxu0 0.0
          %636 = vmatpush2.msra.mxu0 0.0
          %637 = vmatprep.subr.mxu0 0.0
          %638 = vmatpush2.msra.mxu0 0.0
          %639 = vmatprep.subr.mxu0 0.0
          %640 = vmatpush2.msra.mxu0 0.0
          %641 = vmatprep.subr.mxu0 0.0
          %642 = vmatpush2.msra.mxu0 0.0
          %643 = vmatprep.subr.mxu0 0.0
          %644 = vmatpush2.msra.mxu0 0.0
          %645 = vmatprep.subr.mxu0 0.0
          %646 = vmatpush2.msra.mxu0 0.0
          %647 = vmatprep.subr.mxu0 0.0
          %648 = vmatpush2.msra.mxu0 0.0
          %649 = vmatprep.subr.mxu0 0.0
          %650 = vmatpush2.msra.mxu0 0.0
          %651 = vmatprep.subr.mxu0 0.0
          %652 = vmatpush2.msra.mxu0 0.0
          %653 = vmatprep.subr.mxu0 0.0
          %654 = vmatpush2.msra.mxu0 0.0
          %655 = vmatprep.subr.mxu0 0.0
          %656 = vmatpush2.msra.mxu0 0.0
          %657 = vmatprep.mubr.f32.mxu0 0.0
          %658 = vmatmul.mubr.f32.gmra.mxu0 %v591
          %v659 = vpop.f32.mrf.mxu0
          %v660 = vadd.f32 0.0, %v659
          %v661 = vpop.f32.mrf.mxu0
          %662 = vdwg.mxu0
          %v664 = vrot.slane %v660, 1
          %v665 = vrot.slane %v660, 2
          %v666 = vrot.slane %v660, 3
          %v667 = vrot.slane %v660, 4
          %v668 = vrot.slane %v660, 5
          %v669 = vrot.slane %v660, 6
          %v670 = vrot.slane %v660, 7
          %v679 = vadd.f32 %v558, %v660
          %v680 = vadd.f32 %v559, %v664
          %v681 = vadd.f32 %v560, %v665
          %v682 = vadd.f32 %v561, %v666
          %v683 = vadd.f32 %v562, %v667
          %v684 = vadd.f32 %v563, %v668
          %v685 = vadd.f32 %v564, %v669
          %v686 = vadd.f32 %v565, %v670
          %vm687 = vcmask 253952
          %688 = vst.msk [vmem:[#allocation2] sm:$0x1] %vm687, %v679
          %689 = vst.msk [vmem:[#allocation2 + $0x2] sm:$0x1] %vm687, %v680
          %690 = vst.msk [vmem:[#allocation2 + $0x4] sm:$0x1] %vm687, %v681
          %691 = vst.msk [vmem:[#allocation2 + $0x6] sm:$0x1] %vm687, %v682
          %692 = vst.msk [vmem:[#allocation2 + $0x8] sm:$0x1] %vm687, %v683
          %693 = vst.msk [vmem:[#allocation2 + $0xa] sm:$0x1] %vm687, %v684
          %694 = vst.msk [vmem:[#allocation2 + $0xc] sm:$0x1] %vm687, %v685
          %695 = vst.msk [vmem:[#allocation2 + $0xe] sm:$0x1] %vm687, %v686
          %v696 = vld [vmem:[%s303 + $0x1] sm:$0x1]
          %v697 = vld [vmem:[%s303 + $0x3] sm:$0x1]
          %v698 = vld [vmem:[%s303 + $0x5] sm:$0x1]
          %v699 = vld [vmem:[%s303 + $0x7] sm:$0x1]
          %v700 = vld [vmem:[%s303 + $0x9] sm:$0x1]
          %v701 = vld [vmem:[%s303 + $0xb] sm:$0x1]
          %v702 = vld [vmem:[%s303 + $0xd] sm:$0x1]
          %v703 = vld [vmem:[%s303 + $0xf] sm:$0x1]
          %v704 = vld [vmem:[%s312 + $0x1] sm:$0x1]
          %v705 = vld [vmem:[%s312 + $0x3] sm:$0x1]
          %v706 = vld [vmem:[%s312 + $0x5] sm:$0x1]
          %v707 = vld [vmem:[%s312 + $0x7] sm:$0x1]
          %v708 = vld [vmem:[%s312 + $0x9] sm:$0x1]
          %v709 = vld [vmem:[%s312 + $0xb] sm:$0x1]
          %v710 = vld [vmem:[%s312 + $0xd] sm:$0x1]
          %v711 = vld [vmem:[%s312 + $0xf] sm:$0x1]
          %v712 = vld [vmem:[%s321 + $0x1] sm:$0x1]
          %v713 = vld [vmem:[%s321 + $0x3] sm:$0x1]
          %v714 = vld [vmem:[%s321 + $0x5] sm:$0x1]
          %v715 = vld [vmem:[%s321 + $0x7] sm:$0x1]
          %v716 = vld [vmem:[%s321 + $0x9] sm:$0x1]
          %v717 = vld [vmem:[%s321 + $0xb] sm:$0x1]
          %v718 = vld [vmem:[%s321 + $0xd] sm:$0x1]
          %v719 = vld [vmem:[%s321 + $0xf] sm:$0x1]
          %v728 = vrot.slane %v697, 7
          %v729 = vsel %vm440, %v728, %v696
          %v730 = vrot.slane %v698, 6
          %v731 = vsel %vm443, %v730, %v729
          %v732 = vrot.slane %v699, 5
          %v733 = vsel %vm446, %v732, %v731
          %v734 = vrot.slane %v700, 4
          %v735 = vsel %vm449, %v734, %v733
          %v736 = vrot.slane %v701, 3
          %v737 = vsel %vm452, %v736, %v735
          %v738 = vrot.slane %v702, 2
          %v739 = vsel %vm455, %v738, %v737
          %v740 = vrot.slane %v703, 1
          %v741 = vsel %vm458, %v740, %v739
          %v750 = vrot.slane %v705, 7
          %v751 = vsel %vm440, %v750, %v704
          %v752 = vrot.slane %v706, 6
          %v753 = vsel %vm443, %v752, %v751
          %v754 = vrot.slane %v707, 5
          %v755 = vsel %vm446, %v754, %v753
          %v756 = vrot.slane %v708, 4
          %v757 = vsel %vm449, %v756, %v755
          %v758 = vrot.slane %v709, 3
          %v759 = vsel %vm452, %v758, %v757
          %v760 = vrot.slane %v710, 2
          %v761 = vsel %vm455, %v760, %v759
          %v762 = vrot.slane %v711, 1
          %v763 = vsel %vm458, %v762, %v761
          %v764 = vsel %vm482, %v741, 0
          %v766 = vsel %vm482, %v763, 0
          %768 = vmatprep.subr.mxu0 0.0
          %769 = vmatpush1.xpose.msra.mxu0 0.0
          %770 = vmatprep.subr.mxu0 0.0
          %771 = vmatpush1.xpose.msra.mxu0 0.0
          %772 = vmatprep.subr.mxu0 0.0
          %773 = vmatpush1.xpose.msra.mxu0 0.0
          %774 = vmatprep.subr.mxu0 0.0
          %775 = vmatpush1.xpose.msra.mxu0 0.0
          %776 = vmatprep.subr.mxu0 0.0
          %777 = vmatpush1.xpose.msra.mxu0 0.0
          %778 = vmatprep.subr.mxu0 0.0
          %779 = vmatpush1.xpose.msra.mxu0 0.0
          %780 = vmatprep.subr.mxu0 0.0
          %781 = vmatpush1.xpose.msra.mxu0 0.0
          %782 = vmatprep.subr.mxu0 0.0
          %783 = vmatpush1.xpose.msra.mxu0 0.0
          %784 = vmatprep.subr.mxu0 0.0
          %785 = vmatpush1.xpose.msra.mxu0 0.0
          %786 = vmatprep.subr.mxu0 0.0
          %787 = vmatpush1.xpose.msra.mxu0 0.0
          %788 = vmatprep.subr.mxu0 0.0
          %789 = vmatpush1.xpose.msra.mxu0 0.0
          %790 = vmatprep.subr.mxu0 0.0
          %791 = vmatpush1.xpose.msra.mxu0 0.0
          %792 = vmatprep.subr.mxu0 0.0
          %793 = vmatpush1.xpose.msra.mxu0 0.0
          %794 = vmatprep.subr.mxu0 0.0
          %795 = vmatpush1.xpose.msra.mxu0 0.0
          %796 = vmatprep.subr.mxu0 0.0
          %797 = vmatpush1.xpose.msra.mxu0 0.0
          %798 = vmatprep.subr.mxu0 0.0
          %799 = vmatpush1.xpose.msra.mxu0 %v766
          %800 = vmatprep.subr.mxu0 0.0
          %801 = vmatpush2.xpose.msra.mxu0 0.0
          %802 = vmatprep.subr.mxu0 0.0
          %803 = vmatpush2.xpose.msra.mxu0 0.0
          %804 = vmatprep.subr.mxu0 0.0
          %805 = vmatpush2.xpose.msra.mxu0 0.0
          %806 = vmatprep.subr.mxu0 0.0
          %807 = vmatpush2.xpose.msra.mxu0 0.0
          %808 = vmatprep.subr.mxu0 0.0
          %809 = vmatpush2.xpose.msra.mxu0 0.0
          %810 = vmatprep.subr.mxu0 0.0
          %811 = vmatpush2.xpose.msra.mxu0 0.0
          %812 = vmatprep.subr.mxu0 0.0
          %813 = vmatpush2.xpose.msra.mxu0 0.0
          %814 = vmatprep.subr.mxu0 0.0
          %815 = vmatpush2.xpose.msra.mxu0 0.0
          %816 = vmatprep.subr.mxu0 0.0
          %817 = vmatpush2.xpose.msra.mxu0 0.0
          %818 = vmatprep.subr.mxu0 0.0
          %819 = vmatpush2.xpose.msra.mxu0 0.0
          %820 = vmatprep.subr.mxu0 0.0
          %821 = vmatpush2.xpose.msra.mxu0 0.0
          %822 = vmatprep.subr.mxu0 0.0
          %823 = vmatpush2.xpose.msra.mxu0 0.0
          %824 = vmatprep.subr.mxu0 0.0
          %825 = vmatpush2.xpose.msra.mxu0 0.0
          %826 = vmatprep.subr.mxu0 0.0
          %827 = vmatpush2.xpose.msra.mxu0 0.0
          %828 = vmatprep.subr.mxu0 0.0
          %829 = vmatpush2.xpose.msra.mxu0 0.0
          %830 = vmatprep.subr.mxu0 0.0
          %831 = vmatpush2.xpose.msra.mxu0 0.0
          %832 = vmatprep.mubr.f32.mxu0 0.0
          %833 = vmatmul.mubr.f32.gmra.mxu0 %v764
          %v834 = vpop.f32.mrf.mxu0
          %v835 = vadd.f32 0.0, %v834
          %v836 = vpop.f32.mrf.mxu0
          %837 = vdwg.mxu0
          %v838 = vsel %vm406, %v835, 0.0
          %v839 = vld [vmem:[#allocation2 + $0x1] sm:$0x1]
          %v840 = vld [vmem:[#allocation2 + $0x3] sm:$0x1]
          %v841 = vld [vmem:[#allocation2 + $0x5] sm:$0x1]
          %v842 = vld [vmem:[#allocation2 + $0x7] sm:$0x1]
          %v843 = vld [vmem:[#allocation2 + $0x9] sm:$0x1]
          %v844 = vld [vmem:[#allocation2 + $0xb] sm:$0x1]
          %v845 = vld [vmem:[#allocation2 + $0xd] sm:$0x1]
          %v846 = vld [vmem:[#allocation2 + $0xf] sm:$0x1]
          %v855 = vrot.slane %v713, 7
          %v856 = vsel %vm440, %v855, %v712
          %v857 = vrot.slane %v714, 6
          %v858 = vsel %vm443, %v857, %v856
          %v859 = vrot.slane %v715, 5
          %v860 = vsel %vm446, %v859, %v858
          %v861 = vrot.slane %v716, 4
          %v862 = vsel %vm449, %v861, %v860
          %v863 = vrot.slane %v717, 3
          %v864 = vsel %vm452, %v863, %v862
          %v865 = vrot.slane %v718, 2
          %v866 = vsel %vm455, %v865, %v864
          %v867 = vrot.slane %v719, 1
          %v868 = vsel %vm458, %v867, %v866
          %v871 = vsel %vm589, %v838, 0
          %873 = vmatprep.subr.mxu0 0.0
          %874 = vmatpush1.msra.mxu0 0.0
          %875 = vmatprep.subr.mxu0 0.0
          %876 = vmatpush1.msra.mxu0 0.0
          %877 = vmatprep.subr.mxu0 0.0
          %878 = vmatpush1.msra.mxu0 0.0
          %879 = vmatprep.subr.mxu0 0.0
          %880 = vmatpush1.msra.mxu0 0.0
          %881 = vmatprep.subr.mxu0 0.0
          %882 = vmatpush1.msra.mxu0 0.0
          %883 = vmatprep.subr.mxu0 0.0
          %884 = vmatpush1.msra.mxu0 0.0
          %885 = vmatprep.subr.mxu0 0.0
          %886 = vmatpush1.msra.mxu0 0.0
          %887 = vmatprep.subr.mxu0 0.0
          %888 = vmatpush1.msra.mxu0 0.0
          %889 = vmatprep.subr.mxu0 0.0
          %890 = vmatpush1.msra.mxu0 0.0
          %891 = vmatprep.subr.mxu0 0.0
          %892 = vmatpush1.msra.mxu0 0.0
          %893 = vmatprep.subr.mxu0 0.0
          %894 = vmatpush1.msra.mxu0 0.0
          %895 = vmatprep.subr.mxu0 0.0
          %896 = vmatpush1.msra.mxu0 0.0
          %897 = vmatprep.subr.mxu0 0.0
          %898 = vmatpush1.msra.mxu0 0.0
          %899 = vmatprep.subr.mxu0 0.0
          %900 = vmatpush1.msra.mxu0 0.0
          %901 = vmatprep.subr.mxu0 0.0
          %902 = vmatpush1.msra.mxu0 0.0
          %903 = vmatprep.subr.mxu0 0.0
          %904 = vmatpush1.msra.mxu0 %v868
          %905 = vmatprep.subr.mxu0 0.0
          %906 = vmatpush2.msra.mxu0 0.0
          %907 = vmatprep.subr.mxu0 0.0
          %908 = vmatpush2.msra.mxu0 0.0
          %909 = vmatprep.subr.mxu0 0.0
          %910 = vmatpush2.msra.mxu0 0.0
          %911 = vmatprep.subr.mxu0 0.0
          %912 = vmatpush2.msra.mxu0 0.0
          %913 = vmatprep.subr.mxu0 0.0
          %914 = vmatpush2.msra.mxu0 0.0
          %915 = vmatprep.subr.mxu0 0.0
          %916 = vmatpush2.msra.mxu0 0.0
          %917 = vmatprep.subr.mxu0 0.0
          %918 = vmatpush2.msra.mxu0 0.0
          %919 = vmatprep.subr.mxu0 0.0
          %920 = vmatpush2.msra.mxu0 0.0
          %921 = vmatprep.subr.mxu0 0.0
          %922 = vmatpush2.msra.mxu0 0.0
          %923 = vmatprep.subr.mxu0 0.0
          %924 = vmatpush2.msra.mxu0 0.0
          %925 = vmatprep.subr.mxu0 0.0
          %926 = vmatpush2.msra.mxu0 0.0
          %927 = vmatprep.subr.mxu0 0.0
          %928 = vmatpush2.msra.mxu0 0.0
          %929 = vmatprep.subr.mxu0 0.0
          %930 = vmatpush2.msra.mxu0 0.0
          %931 = vmatprep.subr.mxu0 0.0
          %932 = vmatpush2.msra.mxu0 0.0
          %933 = vmatprep.subr.mxu0 0.0
          %934 = vmatpush2.msra.mxu0 0.0
          %935 = vmatprep.subr.mxu0 0.0
          %936 = vmatpush2.msra.mxu0 0.0
          %937 = vmatprep.mubr.f32.mxu0 0.0
          %938 = vmatmul.mubr.f32.gmra.mxu0 %v871
          %v939 = vpop.f32.mrf.mxu0
          %v940 = vadd.f32 0.0, %v939
          %v941 = vpop.f32.mrf.mxu0
          %942 = vdwg.mxu0
          %v944 = vrot.slane %v940, 1
          %v945 = vrot.slane %v940, 2
          %v946 = vrot.slane %v940, 3
          %v947 = vrot.slane %v940, 4
          %v948 = vrot.slane %v940, 5
          %v949 = vrot.slane %v940, 6
          %v950 = vrot.slane %v940, 7
          %v959 = vadd.f32 %v839, %v940
          %v960 = vadd.f32 %v840, %v944
          %v961 = vadd.f32 %v841, %v945
          %v962 = vadd.f32 %v842, %v946
          %v963 = vadd.f32 %v843, %v947
          %v964 = vadd.f32 %v844, %v948
          %v965 = vadd.f32 %v845, %v949
          %v966 = vadd.f32 %v846, %v950
          %967 = vst.msk [vmem:[#allocation2 + $0x1] sm:$0x1] %vm687, %v959
          %968 = vst.msk [vmem:[#allocation2 + $0x3] sm:$0x1] %vm687, %v960
          %969 = vst.msk [vmem:[#allocation2 + $0x5] sm:$0x1] %vm687, %v961
          %970 = vst.msk [vmem:[#allocation2 + $0x7] sm:$0x1] %vm687, %v962
          %971 = vst.msk [vmem:[#allocation2 + $0x9] sm:$0x1] %vm687, %v963
          %972 = vst.msk [vmem:[#allocation2 + $0xb] sm:$0x1] %vm687, %v964
          %973 = vst.msk [vmem:[#allocation2 + $0xd] sm:$0x1] %vm687, %v965
          %974 = vst.msk [vmem:[#allocation2 + $0xf] sm:$0x1] %vm687, %v966
        $region56: #{tpu_custom_call.1} parent=35 // pred_fallthru
          _
        %p975 = scmp.eq.s32.totalorder %s31, 1
        // Predicated region
        $region57: #{tpu_custom_call.1} parent=35 // pred_check
          %p976 = pneg %p975
        $region58: #{tpu_custom_call.1} parent=35 // pred_check_branch
          %978 = sbr.rel (%p976) target = $region60
        $region59: #{tpu_custom_call.1} parent=35 // pred_region
          %v979 = vld [vmem:[%s378] sm:$0xff]
          %v980 = vsub.f32 0.0, %v979
          %v981 = vmul.f32 %v980, 1.442695
          %v982 = vpow.pop %v981
          %v983 = vld [vmem:[#allocation2] sm:$0x3]
          %v984 = vld [vmem:[#allocation2 + $0x2] sm:$0x3]
          %v985 = vld [vmem:[#allocation2 + $0x4] sm:$0x3]
          %v986 = vld [vmem:[#allocation2 + $0x6] sm:$0x3]
          %v987 = vld [vmem:[#allocation2 + $0x8] sm:$0x3]
          %v988 = vld [vmem:[#allocation2 + $0xa] sm:$0x3]
          %v989 = vld [vmem:[#allocation2 + $0xc] sm:$0x3]
          %v990 = vld [vmem:[#allocation2 + $0xe] sm:$0x3]
          %v991 = vlaneseq
          %v992 = vshrl.u32 %v991, 7
          %v993 = vsub.s32 0, %v992
          %v994 = vrot.slane %v982, %v993
          %996 = vbcast.lane.b32.xlu0 %v994, 256
          %v997 = vpop.permute.xlu0 %996
          %v998 = vlaneseq
          %v999 = vshrl.u32 %v998, 7
          %v1000 = vsub.s32 1, %v999
          %v1001 = vrot.slane %v982, %v1000
          %1003 = vbcast.lane.b32.xlu0 %v1001, 256
          %v1004 = vpop.permute.xlu0 %1003
          %v1005 = vlaneseq
          %v1006 = vshrl.u32 %v1005, 7
          %v1007 = vsub.s32 2, %v1006
          %v1008 = vrot.slane %v982, %v1007
          %1010 = vbcast.lane.b32.xlu0 %v1008, 256
          %v1011 = vpop.permute.xlu0 %1010
          %v1012 = vlaneseq
          %v1013 = vshrl.u32 %v1012, 7
          %v1014 = vsub.s32 3, %v1013
          %v1015 = vrot.slane %v982, %v1014
          %1017 = vbcast.lane.b32.xlu0 %v1015, 256
          %v1018 = vpop.permute.xlu0 %1017
          %v1019 = vlaneseq
          %v1020 = vshrl.u32 %v1019, 7
          %v1021 = vsub.s32 4, %v1020
          %v1022 = vrot.slane %v982, %v1021
          %1024 = vbcast.lane.b32.xlu0 %v1022, 256
          %v1025 = vpop.permute.xlu0 %1024
          %v1026 = vlaneseq
          %v1027 = vshrl.u32 %v1026, 7
          %v1028 = vsub.s32 5, %v1027
          %v1029 = vrot.slane %v982, %v1028
          %1031 = vbcast.lane.b32.xlu0 %v1029, 256
          %v1032 = vpop.permute.xlu0 %1031
          %v1033 = vlaneseq
          %v1034 = vshrl.u32 %v1033, 7
          %v1035 = vsub.s32 6, %v1034
          %v1036 = vrot.slane %v982, %v1035
          %1038 = vbcast.lane.b32.xlu0 %v1036, 256
          %v1039 = vpop.permute.xlu0 %1038
          %v1040 = vlaneseq
          %v1041 = vshrl.u32 %v1040, 7
          %v1042 = vsub.s32 7, %v1041
          %v1043 = vrot.slane %v982, %v1042
          %1045 = vbcast.lane.b32.xlu0 %v1043, 256
          %v1046 = vpop.permute.xlu0 %1045
          %v1047 = vmul.f32 %v983, %v997
          %v1048 = vmul.f32 %v984, %v1004
          %v1049 = vmul.f32 %v985, %v1011
          %v1050 = vmul.f32 %v986, %v1018
          %v1051 = vmul.f32 %v987, %v1025
          %v1052 = vmul.f32 %v988, %v1032
          %v1053 = vmul.f32 %v989, %v1039
          %v1054 = vmul.f32 %v990, %v1046
          %vm1055 = vcmask 254976
          %1056 = vst.msk [vmem:[%s363] sm:$0x3] %vm1055, %v1047
          %1057 = vst.msk [vmem:[%s363 + $0x2] sm:$0x3] %vm1055, %v1048
          %1058 = vst.msk [vmem:[%s363 + $0x4] sm:$0x3] %vm1055, %v1049
          %1059 = vst.msk [vmem:[%s363 + $0x6] sm:$0x3] %vm1055, %v1050
          %1060 = vst.msk [vmem:[%s363 + $0x8] sm:$0x3] %vm1055, %v1051
          %1061 = vst.msk [vmem:[%s363 + $0xa] sm:$0x3] %vm1055, %v1052
          %1062 = vst.msk [vmem:[%s363 + $0xc] sm:$0x3] %vm1055, %v1053
          %1063 = vst.msk [vmem:[%s363 + $0xe] sm:$0x3] %vm1055, %v1054
        $region60: #{tpu_custom_call.1} parent=35 // pred_fallthru
          _
        %s1064 = sand.u32 %s173, 1
        %s1065 = scalar_lea.sflag [#allocation5], %s1064
        %s1066 = sand.u32 %s173, 1
        %s1067 = smul.addr %s1066, 16
        %s1068 = scalar_lea.vmem [#allocation9], %s1067
        // Predicated region
        $region61: #{tpu_custom_call.1} parent=35 // pred_check
          %p1069 = pneg %p183
        $region62: #{tpu_custom_call.1} parent=35 // pred_check_branch
          %1071 = sbr.rel (%p1069) target = $region64
        $region63: #{tpu_custom_call.1} parent=35 // pred_region
          %s1072 = smul.u32 8, %s30
          %s1074 = ssub.s32 256, 256
          %1075 = vsyncadd %s1065, %s1074
          %s1076 = smul.addr %s29, 16
          %s1077 = sadd.s32 %s1072, %s1076
          %s1078 = smul.addr %s1077, 32
          %s1079 = scalar_lea.hbm %s4, %s1078
          %s1080 = sshll.u32 %s1068, 4
          %s1081 = int_to_ptr.vmem [resolvable:$true] %s1080
          %1086 = dma.vmem_to_hbm [thread:$0]  %s1081, 256, %s1079, %s1065, 32, 32, 2
        $region64: #{tpu_custom_call.1} parent=35 // pred_fallthru
          _
      $region36: #{tpu_custom_call.1} parent=5 // pred_fallthru
        _
      %p1087 = scmp.le.s32.totalorder 2, %s19
      // Predicated region
      $region65: #{tpu_custom_call.1} parent=5 // pred_check
        %p1088 = pneg %p1087
      $region66: #{tpu_custom_call.1} parent=5 // pred_check_branch
        %1090 = sbr.rel (%p1088) target = $region68
      $region67: #{tpu_custom_call.1} parent=5 // pred_region
        %s1091 = ssub.s32 %s19, 2
        // Predicated region
        $region69: #{tpu_custom_call.1} parent=67 // pred_check
          %p1092 = pneg %p189
        $region70: #{tpu_custom_call.1} parent=67 // pred_check_branch
          %1094 = sbr.rel (%p1092) target = $region72
        $region71: #{tpu_custom_call.1} parent=67 // pred_region
          %s1095 = sand.u32 %s174, 1
          %s1096 = scalar_lea.sflag [#allocation5], %s1095
          %s1097 = sand.u32 %s174, 1
          %s1098 = smul.addr %s1097, 16
          %s1099 = scalar_lea.vmem [#allocation9], %s1098
          %1100 = dma.done %s1096, 256
        $region72: #{tpu_custom_call.1} parent=67 // pred_fallthru
          _
      $region68: #{tpu_custom_call.1} parent=5 // pred_fallthru
        _
    $region6: #{tpu_custom_call.1} parent=1 // loop_footer
      %s23 = sadd.s32 1, %s19
    $region7: #{tpu_custom_call.1} parent=1 // loop_footer_branch
      %18 = sbr.rel target = $region3
    $region8: #{tpu_custom_call.1} parent=1 // loop_exit
      _
    %1101 = vsyncpa [#allocation4], 1
    %s1102 = scalar_lea.sflag [#allocation4], 1
    %1103 = vsyncpa %s1102, 1
    %1104 = vsyncpa [#allocation7], 1
    %s1105 = scalar_lea.sflag [#allocation7], 1
    %1106 = vsyncpa %s1105, 1
    %1107 = vsyncpa [#allocation5], 1
    %s1108 = scalar_lea.sflag [#allocation5], 1
    %1109 = vsyncpa %s1108, 1

</llo_original>
